<compile_context>
chip_gen: v7x
topology: tpu7x:2x2x1
jax: 0.10.0
libtpu: 0.0.40
codegen_flags: <defaults>
</compile_context>

<pallas_src>
import jax
import jax.numpy as jnp
from jax.experimental import pallas as pl
from jax.experimental.pallas import tpu as pltpu

HIDDEN1 = 128
HIDDEN2 = 32

CHUNK = 256    # rows per in-kernel chunk: h1 chunk = (256, 128) f32 = 32 vregs
MAX_TB = 2048  # max batch-tile rows per grid step (total VMEM use stays ~4 MB)


def _choose_tb(batch):
    """Batch-tile size (rows per grid step)."""
    if batch <= 2 * CHUNK:
        return batch  # one full-array block: no padding, no ragged tile
    tb = MAX_TB
    # Keep >= 2 grid tiles for moderate batches so both v7x TensorCores get work.
    while tb > CHUNK and pl.cdiv(batch, tb) < 2:
        tb //= 2
    return tb


def dqn_kernel(x_ref, w1_ref, b1_ref, w2_ref, b2_ref, w3_ref, b3_ref, out_ref):
    # Tiny weights/biases, resident in VMEM across the whole grid (constant index maps).
    w1t, b1 = w1_ref[...], b1_ref[...]      # (n_obs, 128), (1, 128)
    w2t, b2 = w2_ref[...], b2_ref[...]      # (128, 32),   (1, 32)
    w3t, b3 = w3_ref[...], b3_ref[...]      # (32, n_act), (1, n_act)

    def mlp(xc):
        # TODO(synk): layer 1 has K=n_obs=4, which underfills the MXU; only worth
        # moving to VPU rank-1 FMAs if a bundle dump shows the MXU path binding.
        h = jnp.dot(xc, w1t, preferred_element_type=jnp.float32) + b1
        h = jnp.maximum(h, 0.0)
        h = jnp.dot(h, w2t, preferred_element_type=jnp.float32) + b2
        h = jnp.maximum(h, 0.0)
        h = jnp.dot(h, w3t, preferred_element_type=jnp.float32) + b3
        # Final ReLU matches the reference PyTorch module (it clamps Q-values to >= 0).
        return jnp.maximum(h, 0.0)

    tb = x_ref.shape[0]
    n_full = tb // CHUNK
    rem = tb - n_full * CHUNK

    if n_full > 0:
        def chunk_body(c, carry):
            r0 = pl.multiple_of(c * CHUNK, CHUNK)
            xc = x_ref[pl.ds(r0, CHUNK), :]                        # (CHUNK, n_obs)
            out_ref[pl.ds(r0, CHUNK), :] = mlp(xc).astype(out_ref.dtype)
            return carry

        jax.lax.fori_loop(0, n_full, chunk_body, 0, unroll=True)

    if rem > 0:  # static tail, only when the whole batch tile is < a multiple of CHUNK
        r0 = n_full * CHUNK
        out_ref[pl.ds(r0, rem), :] = mlp(x_ref[pl.ds(r0, rem), :]).astype(out_ref.dtype)


def dqn_forward(x, params):
    """x: (B, n_observation) f32. params: pre-transposed weights (in, out), biases (1, out)."""
    w1t, b1 = params["w1t"], params["b1"]
    w2t, b2 = params["w2t"], params["b2"]
    w3t, b3 = params["w3t"], params["b3"]

    B, n_obs = x.shape
    n_act = w3t.shape[1]

    tb = _choose_tb(B)
    n_tiles = pl.cdiv(B, tb)

    # Full-array blocks with constant index maps: loaded once, stay resident in VMEM.
    const = lambda a: pl.BlockSpec(a.shape, lambda i: (0, 0))

    flops = 2 * B * (n_obs * HIDDEN1 + HIDDEN1 * HIDDEN2 + HIDDEN2 * n_act)
    bytes_accessed = 4 * (
        x.size + B * n_act
        + w1t.size + b1.size + w2t.size + b2.size + w3t.size + b3.size
    )

    return pl.pallas_call(
        dqn_kernel,
        out_shape=jax.ShapeDtypeStruct((B, n_act), jnp.float32),
        grid=(n_tiles,),
        in_specs=[
            pl.BlockSpec((tb, n_obs), lambda i: (i, 0)),   # batch tile of x
            const(w1t), const(b1),
            const(w2t), const(b2),
            const(w3t), const(b3),
        ],
        out_specs=pl.BlockSpec((tb, n_act), lambda i: (i, 0)),
        compiler_params=pltpu.CompilerParams(
            dimension_semantics=("parallel",),   # megacore sharding on v7x; harmless elsewhere
        ),
        cost_estimate=pl.CostEstimate(
            flops=int(flops), transcendentals=0, bytes_accessed=int(bytes_accessed)
        ),
    )(x, w1t, b1, w2t, b2, w3t, b3)


def init_params(key, n_observation, n_action):
    """Deterministic synthetic init matching nn.Linear's uniform scale.

    Stored pre-transposed w.r.t. torch.nn.Linear:
      params["wNt"] == torch_layerN.weight.T   (shape (in, out))
      params["bN"]  == torch_layerN.bias[None] (shape (1, out))
    """
    ks = jax.random.split(key, 6)

    def lin(kw, kb, fan_in, fan_out):
        bound = 1.0 / jnp.sqrt(fan_in)
        wt = jax.random.uniform(kw, (fan_in, fan_out), jnp.float32, -bound, bound)
        b = jax.random.uniform(kb, (1, fan_out), jnp.float32, -bound, bound)
        return wt, b

    w1t, b1 = lin(ks[0], ks[1], n_observation, HIDDEN1)
    w2t, b2 = lin(ks[2], ks[3], HIDDEN1, HIDDEN2)
    w3t, b3 = lin(ks[4], ks[5], HIDDEN2, n_action)
    return {"w1t": w1t, "b1": b1, "w2t": w2t, "b2": b2, "w3t": w3t, "b3": b3}


def ref_forward(x, params):
    h = jnp.maximum(x @ params["w1t"] + params["b1"], 0.0)
    h = jnp.maximum(h @ params["w2t"] + params["b2"], 0.0)
    return jnp.maximum(h @ params["w3t"] + params["b3"], 0.0)


if __name__ == "__main__":
    key = jax.random.PRNGKey(0)
    k_p, k1, k2, k3 = jax.random.split(key, 4)

    n_observation = 4
    n_action = 8

    params = init_params(k_p, n_observation, n_action)

    # Tiny batch: single full-array block (no padding, no ragged tile).
    x1 = jax.random.normal(k1, (2, n_observation), jnp.float32)
    o1 = dqn_forward(x1, params)
    jax.block_until_ready(o1)
    assert o1.shape == (2, n_action)
    assert jnp.allclose(o1, ref_forward(x1, params), atol=1e-4, rtol=1e-4)

    # Odd small batch: single block, exercises the in-kernel remainder chunk.
    x2 = jax.random.normal(k2, (300, n_observation), jnp.float32)
    o2 = dqn_forward(x2, params)
    jax.block_until_ready(o2)
    assert o2.shape == (300, n_action)
    assert jnp.allclose(o2, ref_forward(x2, params), atol=1e-4, rtol=1e-4)

    # Larger batch: 2 grid tiles of 512 rows (ragged last tile), multi-chunk loop.
    x3 = jax.random.normal(k3, (1000, n_observation), jnp.float32)
    o3 = dqn_forward(x3, params)
    jax.block_until_ready(o3)
    assert o3.shape == (1000, n_action)
    assert jnp.allclose(o3, ref_forward(x3, params), atol=1e-4, rtol=1e-4)

    print("KERNEL_OK")
</pallas_src>

<mosaic_0001>
module attributes {stable_mosaic.version = 11 : i64} {
  func.func @dqn_kernel(%arg0: i32, %arg1: memref<2x4xf32, #tpu.memory_space<vmem>>, %arg2: memref<4x128xf32, #tpu.memory_space<vmem>>, %arg3: memref<1x128xf32, #tpu.memory_space<vmem>>, %arg4: memref<128x32xf32, #tpu.memory_space<vmem>>, %arg5: memref<1x32xf32, #tpu.memory_space<vmem>>, %arg6: memref<32x8xf32, #tpu.memory_space<vmem>>, %arg7: memref<1x8xf32, #tpu.memory_space<vmem>>, %arg8: memref<2x8xf32, #tpu.memory_space<vmem>>) attributes {dimension_semantics = [#tpu.dimension_semantics<parallel>], iteration_bounds = array<i64: 1>, scalar_prefetch = 0 : i64, scratch_operands = 0 : i64, tpu.core_type = #tpu.core_type<tc>, window_params = [{transform_indices = @transform_0, window_bounds = array<i64: 2, 4>}, {pipeline_mode = #tpu.pipeline_mode<synchronous>, transform_indices = @transform_1, window_bounds = array<i64: 4, 128>}, {pipeline_mode = #tpu.pipeline_mode<synchronous>, transform_indices = @transform_2, window_bounds = array<i64: 1, 128>}, {pipeline_mode = #tpu.pipeline_mode<synchronous>, transform_indices = @transform_3, window_bounds = array<i64: 128, 32>}, {pipeline_mode = #tpu.pipeline_mode<synchronous>, transform_indices = @transform_4, window_bounds = array<i64: 1, 32>}, {pipeline_mode = #tpu.pipeline_mode<synchronous>, transform_indices = @transform_5, window_bounds = array<i64: 32, 8>}, {pipeline_mode = #tpu.pipeline_mode<synchronous>, transform_indices = @transform_6, window_bounds = array<i64: 1, 8>}, {transform_indices = @transform_7, window_bounds = array<i64: 2, 8>}]} {
    %c0 = arith.constant 0 : index
    %c0_0 = arith.constant 0 : index
    %0 = vector.load %arg2[%c0, %c0_0] : memref<4x128xf32, #tpu.memory_space<vmem>>, vector<4x128xf32>
    %c0_1 = arith.constant 0 : index
    %c0_2 = arith.constant 0 : index
    %1 = vector.load %arg3[%c0_1, %c0_2] : memref<1x128xf32, #tpu.memory_space<vmem>>, vector<1x128xf32>
    %c0_3 = arith.constant 0 : index
    %c0_4 = arith.constant 0 : index
    %2 = vector.load %arg4[%c0_3, %c0_4] : memref<128x32xf32, #tpu.memory_space<vmem>>, vector<128x32xf32>
    %c0_5 = arith.constant 0 : index
    %c0_6 = arith.constant 0 : index
    %3 = vector.load %arg5[%c0_5, %c0_6] : memref<1x32xf32, #tpu.memory_space<vmem>>, vector<1x32xf32>
    %c0_7 = arith.constant 0 : index
    %c0_8 = arith.constant 0 : index
    %4 = vector.load %arg6[%c0_7, %c0_8] : memref<32x8xf32, #tpu.memory_space<vmem>>, vector<32x8xf32>
    %c0_9 = arith.constant 0 : index
    %c0_10 = arith.constant 0 : index
    %5 = vector.load %arg7[%c0_9, %c0_10] : memref<1x8xf32, #tpu.memory_space<vmem>>, vector<1x8xf32>
    %c0_11 = arith.constant 0 : index
    %c0_12 = arith.constant 0 : index
    %6 = vector.load %arg1[%c0_11, %c0_12] : memref<2x4xf32, #tpu.memory_space<vmem>>, vector<2x4xf32>
    %cst = arith.constant dense<0.000000e+00> : vector<2x128xf32>
    %7 = tpu.matmul %6, %0, %cst {dimension_numbers = #tpu.dot_dimension_numbers<[1], [0], [0], [1], [0, 0, 1, 1], [], []>} : vector<2x4xf32>, vector<4x128xf32>, vector<2x128xf32> -> vector<2x128xf32>
    %8 = vector.broadcast %1 : vector<1x128xf32> to vector<2x128xf32>
    %9 = arith.addf %7, %8 : vector<2x128xf32>
    %cst_13 = arith.constant 0.000000e+00 : f32
    %10 = vector.broadcast %cst_13 : f32 to vector<2x128xf32>
    %11 = arith.maximumf %9, %10 : vector<2x128xf32>
    %cst_14 = arith.constant dense<0.000000e+00> : vector<2x32xf32>
    %12 = tpu.matmul %11, %2, %cst_14 {dimension_numbers = #tpu.dot_dimension_numbers<[1], [0], [0], [1], [0, 0, 1, 1], [], []>} : vector<2x128xf32>, vector<128x32xf32>, vector<2x32xf32> -> vector<2x32xf32>
    %13 = vector.broadcast %3 : vector<1x32xf32> to vector<2x32xf32>
    %14 = arith.addf %12, %13 : vector<2x32xf32>
    %cst_15 = arith.constant 0.000000e+00 : f32
    %15 = vector.broadcast %cst_15 : f32 to vector<2x32xf32>
    %16 = arith.maximumf %14, %15 : vector<2x32xf32>
    %cst_16 = arith.constant dense<0.000000e+00> : vector<2x8xf32>
    %17 = tpu.matmul %16, %4, %cst_16 {dimension_numbers = #tpu.dot_dimension_numbers<[1], [0], [0], [1], [0, 0, 1, 1], [], []>} : vector<2x32xf32>, vector<32x8xf32>, vector<2x8xf32> -> vector<2x8xf32>
    %18 = vector.broadcast %5 : vector<1x8xf32> to vector<2x8xf32>
    %19 = arith.addf %17, %18 : vector<2x8xf32>
    %cst_17 = arith.constant 0.000000e+00 : f32
    %20 = vector.broadcast %cst_17 : f32 to vector<2x8xf32>
    %21 = arith.maximumf %19, %20 : vector<2x8xf32>
    %c0_18 = arith.constant 0 : index
    %c0_19 = arith.constant 0 : index
    %22 = vector.load %arg8[%c0_18, %c0_19] : memref<2x8xf32, #tpu.memory_space<vmem>>, vector<2x8xf32>
    tpu.vector_store %arg8[%c0_18, %c0_19], %21 {strides = array<i32>} : memref<2x8xf32, #tpu.memory_space<vmem>>, vector<2x8xf32>,
    return
  }
  func.func @transform_0(%arg0: i32) -> (i32, i32) {
    %c0_i32 = arith.constant 0 : i32
    %c0_i32_0 = arith.constant 0 : i32
    return %arg0, %c0_i32 : i32, i32
  }
  func.func @transform_1(%arg0: i32) -> (i32, i32) {
    %c0_i32 = arith.constant 0 : i32
    %c0_i32_0 = arith.constant 0 : i32
    %c0_i32_1 = arith.constant 0 : i32
    return %c0_i32, %c0_i32_0 : i32, i32
  }
  func.func @transform_2(%arg0: i32) -> (i32, i32) {
    %c0_i32 = arith.constant 0 : i32
    %c0_i32_0 = arith.constant 0 : i32
    %c0_i32_1 = arith.constant 0 : i32
    return %c0_i32, %c0_i32_0 : i32, i32
  }
  func.func @transform_3(%arg0: i32) -> (i32, i32) {
    %c0_i32 = arith.constant 0 : i32
    %c0_i32_0 = arith.constant 0 : i32
    %c0_i32_1 = arith.constant 0 : i32
    return %c0_i32, %c0_i32_0 : i32, i32
  }
  func.func @transform_4(%arg0: i32) -> (i32, i32) {
    %c0_i32 = arith.constant 0 : i32
    %c0_i32_0 = arith.constant 0 : i32
    %c0_i32_1 = arith.constant 0 : i32
    return %c0_i32, %c0_i32_0 : i32, i32
  }
  func.func @transform_5(%arg0: i32) -> (i32, i32) {
    %c0_i32 = arith.constant 0 : i32
    %c0_i32_0 = arith.constant 0 : i32
    %c0_i32_1 = arith.constant 0 : i32
    return %c0_i32, %c0_i32_0 : i32, i32
  }
  func.func @transform_6(%arg0: i32) -> (i32, i32) {
    %c0_i32 = arith.constant 0 : i32
    %c0_i32_0 = arith.constant 0 : i32
    %c0_i32_1 = arith.constant 0 : i32
    return %c0_i32, %c0_i32_0 : i32, i32
  }
  func.func @transform_7(%arg0: i32) -> (i32, i32) {
    %c0_i32 = arith.constant 0 : i32
    %c0_i32_0 = arith.constant 0 : i32
    return %arg0, %c0_i32 : i32, i32
  }
}

</mosaic_0001>

<llo_original>
// kernel: tpu_custom_call.1
$region0: #{tpu_custom_call.1}
  #allocation0 [shape = 'u32[]', space=smem, size = 0x4, offset = 0x4, fixed_abs, tag = 'smem constant byte address 0x4 - core index']
  #allocation1 [shape = 'u32[144,128]{1,0:T(1,128)}', space=vmem, size = 0x12000, scoped, tag = 'internal scratch']
  %s0 = inlined_call_operand.vmem [shape: f32[2,4], index: 0, kind: input, shape index: {}]
  %s1 = inlined_call_operand.vmem [shape: f32[4,128], index: 1, kind: input, shape index: {}]
  %s2 = inlined_call_operand.vmem [shape: f32[1,128], index: 2, kind: input, shape index: {}]
  %s3 = inlined_call_operand.vmem [shape: f32[128,32], index: 3, kind: input, shape index: {}]
  %s4 = inlined_call_operand.vmem [shape: f32[1,32], index: 4, kind: input, shape index: {}]
  %s5 = inlined_call_operand.vmem [shape: f32[32,8], index: 5, kind: input, shape index: {}]
  %s6 = inlined_call_operand.vmem [shape: f32[1,8], index: 6, kind: input, shape index: {}]
  %s7 = inlined_call_operand.hbm [shape: f32[2,8], index: 7, kind: output, shape index: {}]
  %s8 = sld [smem:[#allocation0]]
  $region38: #{tpu_custom_call.1} parent=0
    _
  %s10 = ssub.s32 1, %s8
  %s11 = scalar_select 0, %s10, %s8
  $region1: #{tpu_custom_call.1} parent=0
    #allocation2 [shape = 'u8[1024]{0}', space=vmem, size = 0x400, scoped, tag = 'output window, operand 0, single buffered']
    #allocation3 [shape = 's32[1]{0}', space=sflag, size = 0x4, scoped, tag = 'scoped memory for tpu_custom_call.1']
    %12 = vsyncpa [#allocation3], 0
    // Predicated region
    $region2: #{tpu_custom_call.1} parent=1 // pred_check
      _
    $region3: #{tpu_custom_call.1} parent=1 // pred_check_branch
      %14 = sbr.rel (0) target = $region5
    $region4: #{tpu_custom_call.1} parent=1 // pred_region
      _
    $region5: #{tpu_custom_call.1} parent=1 // pred_fallthru
      _
    // Predicated region
    $region6: #{tpu_custom_call.1} parent=1 // pred_check
      _
    $region7: #{tpu_custom_call.1} parent=1 // pred_check_branch
      %16 = sbr.rel (0) target = $region9
    $region8: #{tpu_custom_call.1} parent=1 // pred_region
      _
    $region9: #{tpu_custom_call.1} parent=1 // pred_fallthru
      _
    // Predicated region
    $region10: #{tpu_custom_call.1} parent=1 // pred_check
      _
    $region11: #{tpu_custom_call.1} parent=1 // pred_check_branch
      %18 = sbr.rel (0) target = $region13
    $region12: #{tpu_custom_call.1} parent=1 // pred_region
      _
    $region13: #{tpu_custom_call.1} parent=1 // pred_fallthru
      _
    // Predicated region
    $region14: #{tpu_custom_call.1} parent=1 // pred_check
      _
    $region15: #{tpu_custom_call.1} parent=1 // pred_check_branch
      %20 = sbr.rel (0) target = $region17
    $region16: #{tpu_custom_call.1} parent=1 // pred_region
      _
    $region17: #{tpu_custom_call.1} parent=1 // pred_fallthru
      _
    // Predicated region
    $region18: #{tpu_custom_call.1} parent=1 // pred_check
      _
    $region19: #{tpu_custom_call.1} parent=1 // pred_check_branch
      %22 = sbr.rel (0) target = $region21
    $region20: #{tpu_custom_call.1} parent=1 // pred_region
      _
    $region21: #{tpu_custom_call.1} parent=1 // pred_fallthru
      _
    // Predicated region
    $region22: #{tpu_custom_call.1} parent=1 // pred_check
      _
    $region23: #{tpu_custom_call.1} parent=1 // pred_check_branch
      %24 = sbr.rel (0) target = $region25
    $region24: #{tpu_custom_call.1} parent=1 // pred_region
      _
    $region25: #{tpu_custom_call.1} parent=1 // pred_fallthru
      _
    // Predicated region
    $region26: #{tpu_custom_call.1} parent=1 // pred_check
      _
    $region27: #{tpu_custom_call.1} parent=1 // pred_check_branch
      %26 = sbr.rel (0) target = $region29
    $region28: #{tpu_custom_call.1} parent=1 // pred_region
      _
    $region29: #{tpu_custom_call.1} parent=1 // pred_fallthru
      _
    %v27 = vld [vmem:[%s1] sm:$0xf]
    %v28 = vld [vmem:[%s2] sm:$0x1]
    %v29 = vld [vmem:[%s3] sm:$0xff]
    %v30 = vld [vmem:[%s3 + $0x8] sm:$0xff]
    %v31 = vld [vmem:[%s3 + $0x10] sm:$0xff]
    %v32 = vld [vmem:[%s3 + $0x18] sm:$0xff]
    %v33 = vld [vmem:[%s3 + $0x20] sm:$0xff]
    %v34 = vld [vmem:[%s3 + $0x28] sm:$0xff]
    %v35 = vld [vmem:[%s3 + $0x30] sm:$0xff]
    %v36 = vld [vmem:[%s3 + $0x38] sm:$0xff]
    %v37 = vld [vmem:[%s3 + $0x40] sm:$0xff]
    %v38 = vld [vmem:[%s3 + $0x48] sm:$0xff]
    %v39 = vld [vmem:[%s3 + $0x50] sm:$0xff]
    %v40 = vld [vmem:[%s3 + $0x58] sm:$0xff]
    %v41 = vld [vmem:[%s3 + $0x60] sm:$0xff]
    %v42 = vld [vmem:[%s3 + $0x68] sm:$0xff]
    %v43 = vld [vmem:[%s3 + $0x70] sm:$0xff]
    %v44 = vld [vmem:[%s3 + $0x78] sm:$0xff]
    %v45 = vld [vmem:[%s4] sm:$0x1]
    %v46 = vld [vmem:[%s5] sm:$0xff]
    %v47 = vld [vmem:[%s5 + $0x8] sm:$0xff]
    %v48 = vld [vmem:[%s5 + $0x10] sm:$0xff]
    %v49 = vld [vmem:[%s5 + $0x18] sm:$0xff]
    %v50 = vld [vmem:[%s6] sm:$0x1]
    %v51 = vld [vmem:[%s0] sm:$0x3]
    %v53 = vlaneseq
    %v54 = vshrl.u32 %v53, 7
    %v55 = vsub.s32 0, %v54
    %v56 = vrot.slane %v28, %v55
    %vm58 = vcmask 31744
    %v60 = vsel %vm58, %v51, 0
    %vm62 = vcmask 1043456
    %v64 = vsel %vm62, %v27, 0
    %66 = vmatprep.subr.mxu0 0.0
    %67 = vmatpush1.msra.mxu0 %v64
    %68 = vmatprep.subr.mxu0 0.0
    %69 = vmatpush1.msra.mxu0 0.0
    %70 = vmatprep.subr.mxu0 0.0
    %71 = vmatpush1.msra.mxu0 0.0
    %72 = vmatprep.subr.mxu0 0.0
    %73 = vmatpush1.msra.mxu0 0.0
    %74 = vmatprep.subr.mxu0 0.0
    %75 = vmatpush1.msra.mxu0 0.0
    %76 = vmatprep.subr.mxu0 0.0
    %77 = vmatpush1.msra.mxu0 0.0
    %78 = vmatprep.subr.mxu0 0.0
    %79 = vmatpush1.msra.mxu0 0.0
    %80 = vmatprep.subr.mxu0 0.0
    %81 = vmatpush1.msra.mxu0 0.0
    %82 = vmatprep.subr.mxu0 0.0
    %83 = vmatpush1.msra.mxu0 0.0
    %84 = vmatprep.subr.mxu0 0.0
    %85 = vmatpush1.msra.mxu0 0.0
    %86 = vmatprep.subr.mxu0 0.0
    %87 = vmatpush1.msra.mxu0 0.0
    %88 = vmatprep.subr.mxu0 0.0
    %89 = vmatpush1.msra.mxu0 0.0
    %90 = vmatprep.subr.mxu0 0.0
    %91 = vmatpush1.msra.mxu0 0.0
    %92 = vmatprep.subr.mxu0 0.0
    %93 = vmatpush1.msra.mxu0 0.0
    %94 = vmatprep.subr.mxu0 0.0
    %95 = vmatpush1.msra.mxu0 0.0
    %96 = vmatprep.subr.mxu0 0.0
    %97 = vmatpush1.msra.mxu0 0.0
    %98 = vmatprep.subr.mxu0 0.0
    %99 = vmatpush1.msra.mxu0 0.0
    %100 = vmatprep.subr.mxu0 0.0
    %101 = vmatpush1.msra.mxu0 0.0
    %102 = vmatprep.subr.mxu0 0.0
    %103 = vmatpush1.msra.mxu0 0.0
    %104 = vmatprep.subr.mxu0 0.0
    %105 = vmatpush1.msra.mxu0 0.0
    %106 = vmatprep.subr.mxu0 0.0
    %107 = vmatpush1.msra.mxu0 0.0
    %108 = vmatprep.subr.mxu0 0.0
    %109 = vmatpush1.msra.mxu0 0.0
    %110 = vmatprep.subr.mxu0 0.0
    %111 = vmatpush1.msra.mxu0 0.0
    %112 = vmatprep.subr.mxu0 0.0
    %113 = vmatpush1.msra.mxu0 0.0
    %114 = vmatprep.subr.mxu0 0.0
    %115 = vmatpush1.msra.mxu0 0.0
    %116 = vmatprep.subr.mxu0 0.0
    %117 = vmatpush1.msra.mxu0 0.0
    %118 = vmatprep.subr.mxu0 0.0
    %119 = vmatpush1.msra.mxu0 0.0
    %120 = vmatprep.subr.mxu0 0.0
    %121 = vmatpush1.msra.mxu0 0.0
    %122 = vmatprep.subr.mxu0 0.0
    %123 = vmatpush1.msra.mxu0 0.0
    %124 = vmatprep.subr.mxu0 0.0
    %125 = vmatpush1.msra.mxu0 0.0
    %126 = vmatprep.subr.mxu0 0.0
    %127 = vmatpush1.msra.mxu0 0.0
    %128 = vmatprep.subr.mxu0 0.0
    %129 = vmatpush1.msra.mxu0 0.0
    %130 = vmatprep.mubr.f32.mxu0 0.0
    %131 = vmatmul.mubr.f32.gmra.mrb[0].mxu0 %v60
    %v132 = vpop.f32.mrb[0].mxu0
    %v133 = vadd.f32 %v56, %v132
    %v134 = vpop.f32.mrb[0].mxu0
    %135 = vdwg.mxu0
    %v136 = vmax.f32 %v133, 0.0
    %v138 = vlaneseq
    %v139 = vshrl.u32 %v138, 7
    %v140 = vsub.s32 0, %v139
    %v141 = vrot.slane %v45, %v140
    %143 = vmatprep.subr.mxu0 0.0
    %144 = vmatpush1.msra.mxu0 %v29
    %145 = vmatprep.subr.mxu0 0.0
    %146 = vmatpush1.msra.mxu0 %v30
    %147 = vmatprep.subr.mxu0 0.0
    %148 = vmatpush1.msra.mxu0 %v31
    %149 = vmatprep.subr.mxu0 0.0
    %150 = vmatpush1.msra.mxu0 %v32
    %151 = vmatprep.subr.mxu0 0.0
    %152 = vmatpush1.msra.mxu0 %v33
    %153 = vmatprep.subr.mxu0 0.0
    %154 = vmatpush1.msra.mxu0 %v34
    %155 = vmatprep.subr.mxu0 0.0
    %156 = vmatpush1.msra.mxu0 %v35
    %157 = vmatprep.subr.mxu0 0.0
    %158 = vmatpush1.msra.mxu0 %v36
    %159 = vmatprep.subr.mxu0 0.0
    %160 = vmatpush1.msra.mxu0 %v37
    %161 = vmatprep.subr.mxu0 0.0
    %162 = vmatpush1.msra.mxu0 %v38
    %163 = vmatprep.subr.mxu0 0.0
    %164 = vmatpush1.msra.mxu0 %v39
    %165 = vmatprep.subr.mxu0 0.0
    %166 = vmatpush1.msra.mxu0 %v40
    %167 = vmatprep.subr.mxu0 0.0
    %168 = vmatpush1.msra.mxu0 %v41
    %169 = vmatprep.subr.mxu0 0.0
    %170 = vmatpush1.msra.mxu0 %v42
    %171 = vmatprep.subr.mxu0 0.0
    %172 = vmatpush1.msra.mxu0 %v43
    %173 = vmatprep.subr.mxu0 0.0
    %174 = vmatpush1.msra.mxu0 %v44
    %175 = vmatprep.subr.mxu0 0.0
    %176 = vmatpush1.msra.mxu0 0.0
    %177 = vmatprep.subr.mxu0 0.0
    %178 = vmatpush1.msra.mxu0 0.0
    %179 = vmatprep.subr.mxu0 0.0
    %180 = vmatpush1.msra.mxu0 0.0
    %181 = vmatprep.subr.mxu0 0.0
    %182 = vmatpush1.msra.mxu0 0.0
    %183 = vmatprep.subr.mxu0 0.0
    %184 = vmatpush1.msra.mxu0 0.0
    %185 = vmatprep.subr.mxu0 0.0
    %186 = vmatpush1.msra.mxu0 0.0
    %187 = vmatprep.subr.mxu0 0.0
    %188 = vmatpush1.msra.mxu0 0.0
    %189 = vmatprep.subr.mxu0 0.0
    %190 = vmatpush1.msra.mxu0 0.0
    %191 = vmatprep.subr.mxu0 0.0
    %192 = vmatpush1.msra.mxu0 0.0
    %193 = vmatprep.subr.mxu0 0.0
    %194 = vmatpush1.msra.mxu0 0.0
    %195 = vmatprep.subr.mxu0 0.0
    %196 = vmatpush1.msra.mxu0 0.0
    %197 = vmatprep.subr.mxu0 0.0
    %198 = vmatpush1.msra.mxu0 0.0
    %199 = vmatprep.subr.mxu0 0.0
    %200 = vmatpush1.msra.mxu0 0.0
    %201 = vmatprep.subr.mxu0 0.0
    %202 = vmatpush1.msra.mxu0 0.0
    %203 = vmatprep.subr.mxu0 0.0
    %204 = vmatpush1.msra.mxu0 0.0
    %205 = vmatprep.subr.mxu0 0.0
    %206 = vmatpush1.msra.mxu0 0.0
    %207 = vmatprep.mubr.f32.mxu0 0.0
    %208 = vmatmul.mubr.f32.gmra.mrb[0].mxu0 %v136
    %v209 = vpop.f32.mrb[0].mxu0
    %v210 = vadd.f32 %v141, %v209
    %v211 = vpop.f32.mrb[0].mxu0
    %212 = vdwg.mxu0
    %v213 = vmax.f32 %v210, 0.0
    %v215 = vlaneseq
    %v216 = vshrl.u32 %v215, 7
    %v217 = vsub.s32 0, %v216
    %v218 = vrot.slane %v50, %v217
    %vm220 = vcmask 261120
    %v222 = vsel %vm220, %v213, 0
    %224 = vmatprep.subr.mxu0 0.0
    %225 = vmatpush1.msra.mxu0 %v46
    %226 = vmatprep.subr.mxu0 0.0
    %227 = vmatpush1.msra.mxu0 %v47
    %228 = vmatprep.subr.mxu0 0.0
    %229 = vmatpush1.msra.mxu0 %v48
    %230 = vmatprep.subr.mxu0 0.0
    %231 = vmatpush1.msra.mxu0 %v49
    %232 = vmatprep.subr.mxu0 0.0
    %233 = vmatpush1.msra.mxu0 0.0
    %234 = vmatprep.subr.mxu0 0.0
    %235 = vmatpush1.msra.mxu0 0.0
    %236 = vmatprep.subr.mxu0 0.0
    %237 = vmatpush1.msra.mxu0 0.0
    %238 = vmatprep.subr.mxu0 0.0
    %239 = vmatpush1.msra.mxu0 0.0
    %240 = vmatprep.subr.mxu0 0.0
    %241 = vmatpush1.msra.mxu0 0.0
    %242 = vmatprep.subr.mxu0 0.0
    %243 = vmatpush1.msra.mxu0 0.0
    %244 = vmatprep.subr.mxu0 0.0
    %245 = vmatpush1.msra.mxu0 0.0
    %246 = vmatprep.subr.mxu0 0.0
    %247 = vmatpush1.msra.mxu0 0.0
    %248 = vmatprep.subr.mxu0 0.0
    %249 = vmatpush1.msra.mxu0 0.0
    %250 = vmatprep.subr.mxu0 0.0
    %251 = vmatpush1.msra.mxu0 0.0
    %252 = vmatprep.subr.mxu0 0.0
    %253 = vmatpush1.msra.mxu0 0.0
    %254 = vmatprep.subr.mxu0 0.0
    %255 = vmatpush1.msra.mxu0 0.0
    %256 = vmatprep.subr.mxu0 0.0
    %257 = vmatpush1.msra.mxu0 0.0
    %258 = vmatprep.subr.mxu0 0.0
    %259 = vmatpush1.msra.mxu0 0.0
    %260 = vmatprep.subr.mxu0 0.0
    %261 = vmatpush1.msra.mxu0 0.0
    %262 = vmatprep.subr.mxu0 0.0
    %263 = vmatpush1.msra.mxu0 0.0
    %264 = vmatprep.subr.mxu0 0.0
    %265 = vmatpush1.msra.mxu0 0.0
    %266 = vmatprep.subr.mxu0 0.0
    %267 = vmatpush1.msra.mxu0 0.0
    %268 = vmatprep.subr.mxu0 0.0
    %269 = vmatpush1.msra.mxu0 0.0
    %270 = vmatprep.subr.mxu0 0.0
    %271 = vmatpush1.msra.mxu0 0.0
    %272 = vmatprep.subr.mxu0 0.0
    %273 = vmatpush1.msra.mxu0 0.0
    %274 = vmatprep.subr.mxu0 0.0
    %275 = vmatpush1.msra.mxu0 0.0
    %276 = vmatprep.subr.mxu0 0.0
    %277 = vmatpush1.msra.mxu0 0.0
    %278 = vmatprep.subr.mxu0 0.0
    %279 = vmatpush1.msra.mxu0 0.0
    %280 = vmatprep.subr.mxu0 0.0
    %281 = vmatpush1.msra.mxu0 0.0
    %282 = vmatprep.subr.mxu0 0.0
    %283 = vmatpush1.msra.mxu0 0.0
    %284 = vmatprep.subr.mxu0 0.0
    %285 = vmatpush1.msra.mxu0 0.0
    %286 = vmatprep.subr.mxu0 0.0
    %287 = vmatpush1.msra.mxu0 0.0
    %288 = vmatprep.mubr.f32.mxu0 0.0
    %289 = vmatmul.mubr.f32.gmra.mrb[0].mxu0 %v222
    %v290 = vpop.f32.mrb[0].mxu0
    %v291 = vadd.f32 %v218, %v290
    %v292 = vpop.f32.mrb[0].mxu0
    %293 = vdwg.mxu0
    %v294 = vmax.f32 %v291, 0.0
    %vm295 = vcmask 58368
    %296 = vst.msk [vmem:[#allocation2] sm:$0x3] %vm295, %v294
    // Predicated region
    $region30: #{tpu_custom_call.1} parent=1 // pred_check
      _
    $region31: #{tpu_custom_call.1} parent=1 // pred_check_branch
      %298 = sbr.rel (0) target = $region33
    $region32: #{tpu_custom_call.1} parent=1 // pred_region
      %s300 = ssub.s32 32, 32
      %301 = vsyncadd [#allocation3], %s300
      %s303 = sshll.u32 [#allocation2], 4
      %s304 = int_to_ptr.vmem [resolvable:$true] %s303
      %306 = dma.vmem_to_hbm [thread:$0]  %s304, 32, %s7, [#allocation3]
    $region33: #{tpu_custom_call.1} parent=1 // pred_fallthru
      _
    // Predicated region
    $region34: #{tpu_custom_call.1} parent=1 // pred_check
      _
    $region35: #{tpu_custom_call.1} parent=1 // pred_check_branch
      %308 = sbr.rel (0) target = $region37
    $region36: #{tpu_custom_call.1} parent=1 // pred_region
      %309 = dma.done [#allocation3], 32
    $region37: #{tpu_custom_call.1} parent=1 // pred_fallthru
      _
    %310 = vsyncpa [#allocation3], 1

</llo_original>
